<compile_context>
chip_gen: v5e
topology: v5e:2x2
jax: 0.10.0
libtpu: 0.0.40
codegen_flags: <defaults>
</compile_context>

<pallas_src>
import jax
import jax.numpy as jnp
import numpy as np
from jax.experimental import pallas as pl
from jax.experimental.pallas import tpu as pltpu


def _round_up(x, m):
    return (x + m - 1) // m * m


def _tpu_generation():
    """Best-effort device-kind sniff -> (num_tensorcores_per_chip, has_bf16_valu)."""
    try:
        kind = jax.devices()[0].device_kind.lower()
    except Exception:
        return 1, False
    two_tc = any(t in kind for t in ("v4", "v5p", "v7", "7x"))
    bf16_valu = any(t in kind for t in ("v6", "v7", "7x"))
    return (2 if two_tc else 1), bf16_valu


def make_cin_kernel(Hp, Mp, lane_tile, feature_dtype, mul_in_feature_dtype):
    def cin_kernel(x0_ref, xl_ref, w_ref, o_ref):
        # x0_ref: (Mp, T) f32   xl_ref: (Hp, T) f32
        # w_ref : (OUTp, Hp*Mp) feature_dtype, resident (constant block index)
        # o_ref : (OUTp, T)
        if mul_in_feature_dtype:
            # v6e/v7x (bf16 VALU): cast the small inputs once, multiply in feature dtype so the
            # big slab is only ever written at half width.
            x0 = x0_ref[...].astype(feature_dtype)
            xl = xl_ref[...].astype(feature_dtype)
            z = xl[:, None, :] * x0[None, :, :]
        else:
            # v5e / older: no bf16 VALU -> multiply in f32, round the slab once for the MXU.
            z = (xl_ref[...][:, None, :] * x0_ref[...][None, :, :]).astype(feature_dtype)
        # (Hp, Mp, T) -> (Hp*Mp, T); Mp is a multiple of 8 so this is a tile-aligned relayout.
        z = z.reshape(Hp * Mp, lane_tile)
        o_ref[...] = jnp.dot(
            w_ref[...], z, preferred_element_type=jnp.float32
        ).astype(o_ref.dtype)

    return cin_kernel


def cin_forward(x0, xl, weight, bias, *, lane_tile=None, feature_dtype=jnp.bfloat16):
    """x0: (B, M, K), xl: (B, H, K), weight: (OUT, H*M), bias: (OUT,) -> (B, OUT, K)."""
    B, M, K = x0.shape
    Bx, H, Kx = xl.shape
    OUT = weight.shape[0]
    assert (Bx, Kx) == (B, K)
    assert weight.shape == (OUT, H * M)

    n_tc, bf16_valu = _tpu_generation()
    feat_dt = np.dtype(feature_dtype)
    in_dt = np.dtype(x0.dtype)
    mul_in_feat = bf16_valu or feat_dt.itemsize >= 4

    Mp = _round_up(M, 8)          # pad field dims so sublane tiling / reshapes align
    Hp = _round_up(H, 8)
    OUTp = _round_up(OUT, 8)      # whole sublane groups -> unmasked output stores

    # ---- lane tiling: fold batch into the lane axis and budget VMEM explicitly ----
    L = B * K
    # Per-lane-column VMEM bytes: double-buffered inputs/outputs + in-kernel casts +
    # the feature-map slab counted twice (broadcast result + possible reshape copy) +
    # the f32 dot result before the output cast.
    per_lane = (2 * (Mp + Hp + OUTp) * in_dt.itemsize
                + (Mp + Hp) * feat_dt.itemsize
                + 2 * Hp * Mp * feat_dt.itemsize
                + OUTp * 4)
    w_bytes = OUTp * Hp * Mp * feat_dt.itemsize
    vmem_budget = 20 * 1024 * 1024      # stays well inside v7x's 32 MiB default scoped limit

    if lane_tile is None:
        max_tile = max(128, ((vmem_budget - w_bytes) // per_lane) // 128 * 128)
        max_tile = min(max_tile, 8192)
        # One tile per TensorCore when it fits: avoids per-step grid overhead on 1-TC parts
        # (v5e/v6e) and shards the ("parallel",) axis across both TCs on v4/v5p/v7x.
        target = _round_up(pl.cdiv(L, n_tc), 128)
        lane_tile = min(target, max_tile)
    assert lane_tile % 128 == 0 and lane_tile >= 128, "lane_tile must be a multiple of 128"

    n_tiles = pl.cdiv(L, lane_tile)
    if n_tc > 1 and n_tiles > 1 and n_tiles % n_tc != 0:
        # Keep the tile count an even multiple of the TC count so no core sits idle.
        n_tiles = _round_up(n_tiles, n_tc)
        lane_tile = max(128, _round_up(pl.cdiv(L, n_tiles), 128))
        n_tiles = pl.cdiv(L, lane_tile)
    Lp = n_tiles * lane_tile

    # ---- layout plumbing (fused with the rest of the jit; see note in __main__) ----
    x0_2d = jnp.transpose(x0, (1, 0, 2)).reshape(M, L)       # (M, B*K)
    xl_2d = jnp.transpose(xl, (1, 0, 2)).reshape(H, L)       # (H, B*K)
    x0_2d = jnp.pad(x0_2d, ((0, Mp - M), (0, Lp - L)))
    xl_2d = jnp.pad(xl_2d, ((0, Hp - H), (0, Lp - L)))

    # Conv1d(kernel_size=1) weight, zero-padded onto the (OUTp, Hp, Mp) channel grid and cast to
    # the feature dtype once in the wrapper (it stays resident inside the kernel).
    w3 = jnp.pad(weight.reshape(OUT, H, M), ((0, OUTp - OUT), (0, Hp - H), (0, Mp - M)))
    w2 = w3.reshape(OUTp, Hp * Mp).astype(feature_dtype)

    flops = (2 * OUTp + 1) * Hp * Mp * Lp
    bytes_accessed = (in_dt.itemsize * (Mp + Hp + OUTp) * Lp + w_bytes)
    footprint = per_lane * lane_tile + w_bytes
    vmem_limit = int(min(max(32 * 1024 * 1024, 2 * footprint), 48 * 1024 * 1024))

    out2d = pl.pallas_call(
        make_cin_kernel(Hp, Mp, lane_tile, feature_dtype, mul_in_feat),
        out_shape=jax.ShapeDtypeStruct((OUTp, Lp), x0.dtype),
        grid_spec=pltpu.PrefetchScalarGridSpec(
            num_scalar_prefetch=0,
            grid=(n_tiles,),
            in_specs=[
                pl.BlockSpec((Mp, lane_tile), lambda t: (0, t)),     # x0 lane tile
                pl.BlockSpec((Hp, lane_tile), lambda t: (0, t)),     # xl lane tile
                pl.BlockSpec((OUTp, Hp * Mp), lambda t: (0, 0)),     # conv weight (resident)
            ],
            out_specs=pl.BlockSpec((OUTp, lane_tile), lambda t: (0, t)),
        ),
        compiler_params=pltpu.CompilerParams(
            dimension_semantics=("parallel",),
            vmem_limit_bytes=vmem_limit,
        ),
        cost_estimate=pl.CostEstimate(
            flops=flops, transcendentals=0, bytes_accessed=bytes_accessed),
    )(x0_2d, xl_2d, w2)

    # Un-fold lanes back to (B, OUT, K); padded rows/lanes are sliced off BEFORE the bias add,
    # which XLA fuses into this epilogue.
    out = out2d[:OUT, :L].reshape(OUT, B, K).transpose(1, 0, 2)
    return out + bias[None, :, None]


def cin_reference(x0, xl, weight, bias):
    # Pure-JAX f32 reference matching the PyTorch forward exactly.
    B, M, K = x0.shape
    _, H, _ = xl.shape
    fm = jnp.einsum("bik,bjk->bijk", xl, x0)          # (B, H, M, K)
    fm = fm.reshape(B, H * M, K)
    out = jnp.einsum("oc,bck->bok", weight, fm)       # Conv1d, kernel_size=1
    return out + bias[None, :, None]


if __name__ == "__main__":
    # Shapes implied by the xDeepFM module: 26 sparse fields, emb_size k = 8,
    # CIN layers Conv1d(in=26*26 / 26*12 / 26*12, out=12, kernel_size=1).  Small batch.
    B, M, K, OUT, n_layers = 32, 26, 8, 12, 3

    key = jax.random.PRNGKey(0)
    keys = jax.random.split(key, 1 + 2 * n_layers)
    x0 = jax.random.normal(keys[0], (B, M, K), dtype=jnp.float32)

    layer_params = []
    for l in range(n_layers):
        H = M if l == 0 else OUT
        fan_in = H * M
        bound = 1.0 / np.sqrt(fan_in)
        w = jax.random.uniform(keys[1 + 2 * l], (OUT, H * M), jnp.float32, -bound, bound)
        b = jax.random.uniform(keys[2 + 2 * l], (OUT,), jnp.float32, -bound, bound)
        layer_params.append((w, b))

    # jit the whole wrapper so the transpose/pad prologue and slice/bias epilogue fuse with
    # neighbouring XLA ops instead of standing alone around a microsecond-scale kernel.
    fwd = jax.jit(cin_forward, static_argnames=("lane_tile", "feature_dtype"))

    # Tight structural check (ordering / padding / tiling) with f32 feature maps.
    out_f32 = jax.block_until_ready(
        fwd(x0, x0, *layer_params[0], feature_dtype=jnp.float32))
    ref0 = cin_reference(x0, x0, *layer_params[0])
    np.testing.assert_allclose(np.asarray(out_f32), np.asarray(ref0), rtol=1e-4, atol=1e-4)

    # Full 3-layer CIN stack on the fast (bf16 feature-map) path, each layer checked in
    # isolation against the f32 reference (bf16 slab + f32 accumulation over a 312/676-deep
    # contraction -> loose tolerance).
    xl = x0
    for l in range(n_layers):
        w, b = layer_params[l]
        out = jax.block_until_ready(fwd(x0, xl, w, b))
        assert out.shape == (B, OUT, K)
        ref = cin_reference(x0, xl, w, b)
        np.testing.assert_allclose(np.asarray(out), np.asarray(ref), rtol=5e-2, atol=5e-2)
        xl = out

    print("KERNEL_OK")
</pallas_src>

<mosaic_0001>
module attributes {stable_mosaic.version = 11 : i64} {
  func.func @cin_kernel(%arg0: i32, %arg1: memref<32x256xf32, #tpu.memory_space<vmem>>, %arg2: memref<32x256xf32, #tpu.memory_space<vmem>>, %arg3: memref<16x1024xf32, #tpu.memory_space<vmem>>, %arg4: memref<16x256xf32, #tpu.memory_space<vmem>>) attributes {dimension_semantics = [#tpu.dimension_semantics<parallel>], iteration_bounds = array<i64: 1>, scalar_prefetch = 0 : i64, scratch_operands = 0 : i64, tpu.core_type = #tpu.core_type<tc>, window_params = [{transform_indices = @transform_0, window_bounds = array<i64: 32, 256>}, {transform_indices = @transform_1, window_bounds = array<i64: 32, 256>}, {pipeline_mode = #tpu.pipeline_mode<synchronous>, transform_indices = @transform_2, window_bounds = array<i64: 16, 1024>}, {transform_indices = @transform_3, window_bounds = array<i64: 16, 256>}]} {
    %c0 = arith.constant 0 : index
    %c0_0 = arith.constant 0 : index
    %0 = vector.load %arg1[%c0, %c0_0] : memref<32x256xf32, #tpu.memory_space<vmem>>, vector<32x256xf32>
    %c0_1 = arith.constant 0 : index
    %c0_2 = arith.constant 0 : index
    %1 = vector.load %arg2[%c0_1, %c0_2] : memref<32x256xf32, #tpu.memory_space<vmem>>, vector<32x256xf32>
    %2 = vector.shape_cast %1 : vector<32x256xf32> to vector<32x1x256xf32>
    %3 = vector.shape_cast %0 : vector<32x256xf32> to vector<1x32x256xf32>
    %4 = vector.broadcast %2 : vector<32x1x256xf32> to vector<32x32x256xf32>
    %5 = vector.broadcast %3 : vector<1x32x256xf32> to vector<32x32x256xf32>
    %6 = arith.mulf %4, %5 : vector<32x32x256xf32>
    %7 = vector.shape_cast %6 : vector<32x32x256xf32> to vector<1024x256xf32>
    %c0_3 = arith.constant 0 : index
    %c0_4 = arith.constant 0 : index
    %8 = vector.load %arg3[%c0_3, %c0_4] : memref<16x1024xf32, #tpu.memory_space<vmem>>, vector<16x1024xf32>
    %cst = arith.constant dense<0.000000e+00> : vector<16x256xf32>
    %9 = tpu.matmul %8, %7, %cst {dimension_numbers = #tpu.dot_dimension_numbers<[1], [0], [0], [1], [0, 0, 1, 1], [], []>} : vector<16x1024xf32>, vector<1024x256xf32>, vector<16x256xf32> -> vector<16x256xf32>
    %c0_5 = arith.constant 0 : index
    %c0_6 = arith.constant 0 : index
    %10 = vector.load %arg4[%c0_5, %c0_6] : memref<16x256xf32, #tpu.memory_space<vmem>>, vector<16x256xf32>
    tpu.vector_store %arg4[%c0_5, %c0_6], %9 {strides = array<i32>} : memref<16x256xf32, #tpu.memory_space<vmem>>, vector<16x256xf32>,
    return
  }
  func.func @transform_0(%arg0: i32) -> (i32, i32) {
    %c0_i32 = arith.constant 0 : i32
    %c0_i32_0 = arith.constant 0 : i32
    return %c0_i32, %arg0 : i32, i32
  }
  func.func @transform_1(%arg0: i32) -> (i32, i32) {
    %c0_i32 = arith.constant 0 : i32
    %c0_i32_0 = arith.constant 0 : i32
    return %c0_i32, %arg0 : i32, i32
  }
  func.func @transform_2(%arg0: i32) -> (i32, i32) {
    %c0_i32 = arith.constant 0 : i32
    %c0_i32_0 = arith.constant 0 : i32
    %c0_i32_1 = arith.constant 0 : i32
    return %c0_i32, %c0_i32_0 : i32, i32
  }
  func.func @transform_3(%arg0: i32) -> (i32, i32) {
    %c0_i32 = arith.constant 0 : i32
    %c0_i32_0 = arith.constant 0 : i32
    return %c0_i32, %arg0 : i32, i32
  }
}

</mosaic_0001>

<llo_original>
// kernel: cin_forward.1
$region0: #{cin_forward.1}
  #allocation0 [shape = 'u32[]', space=smem, size = 0x4, offset = 0x4, fixed_abs, tag = 'smem constant byte address 0x4 - core index']
  #allocation1 [shape = 'u32[72,128]{1,0:T(1,128)}', space=vmem, size = 0x9000, scoped, tag = 'internal scratch']
  %s0 = inlined_call_operand.vmem [shape: f32[32,256], index: 0, kind: input, shape index: {}]
  %s1 = inlined_call_operand.vmem [shape: f32[32,256], index: 1, kind: input, shape index: {}]
  %s2 = inlined_call_operand.vmem [shape: f32[16,1024], index: 2, kind: input, shape index: {}]
  %s3 = inlined_call_operand.vmem [shape: f32[16,256], index: 3, kind: output, shape index: {}]
  %s4 = sld [smem:[#allocation0]]
  $region22: #{cin_forward.1} parent=0
    _
  %s6 = ssub.s32 1, %s4
  %s7 = scalar_select 0, %s6, %s4
  // Predicated region
  $region2: #{cin_forward.1} parent=0 // pred_check
    _
  $region3: #{cin_forward.1} parent=0 // pred_check_branch
    %9 = sbr.rel (0) target = $region5
  $region4: #{cin_forward.1} parent=0 // pred_region
    _
  $region5: #{cin_forward.1} parent=0 // pred_fallthru
    _
  // Predicated region
  $region6: #{cin_forward.1} parent=0 // pred_check
    _
  $region7: #{cin_forward.1} parent=0 // pred_check_branch
    %11 = sbr.rel (0) target = $region9
  $region8: #{cin_forward.1} parent=0 // pred_region
    _
  $region9: #{cin_forward.1} parent=0 // pred_fallthru
    _
  // Predicated region
  $region10: #{cin_forward.1} parent=0 // pred_check
    _
  $region11: #{cin_forward.1} parent=0 // pred_check_branch
    %13 = sbr.rel (0) target = $region13
  $region12: #{cin_forward.1} parent=0 // pred_region
    _
  $region13: #{cin_forward.1} parent=0 // pred_fallthru
    _
  %v14 = vld [vmem:[%s0] sm:$0xff]
  %v15 = vld [vmem:[%s0 + $0x8] sm:$0xff]
  %v16 = vld [vmem:[%s0 + $0x10] sm:$0xff]
  %v17 = vld [vmem:[%s0 + $0x18] sm:$0xff]
  %v18 = vld [vmem:[%s0 + $0x20] sm:$0xff]
  %v19 = vld [vmem:[%s0 + $0x28] sm:$0xff]
  %v20 = vld [vmem:[%s0 + $0x30] sm:$0xff]
  %v21 = vld [vmem:[%s0 + $0x38] sm:$0xff]
  %v22 = vld [vmem:[%s1] sm:$0xff]
  %v23 = vld [vmem:[%s1 + $0x8] sm:$0xff]
  %v24 = vld [vmem:[%s1 + $0x10] sm:$0xff]
  %v25 = vld [vmem:[%s1 + $0x18] sm:$0xff]
  %v26 = vld [vmem:[%s1 + $0x20] sm:$0xff]
  %v27 = vld [vmem:[%s1 + $0x28] sm:$0xff]
  %v28 = vld [vmem:[%s1 + $0x30] sm:$0xff]
  %v29 = vld [vmem:[%s1 + $0x38] sm:$0xff]
  %v38 = vrot.slane %v23, 7
  %v39 = vrot.slane %v25, 7
  %v40 = vrot.slane %v27, 7
  %v41 = vrot.slane %v29, 7
  %vm42 = vcmask 1040384
  %v43 = vsel %vm42, %v22, %v38
  %vm44 = vcmask 1041409
  %v45 = vsel %vm44, %v22, %v38
  %v46 = vrot.slane %v45, 1
  %vm47 = vcmask 1042434
  %v48 = vsel %vm47, %v22, %v38
  %v49 = vrot.slane %v48, 2
  %vm50 = vcmask 1043459
  %v51 = vsel %vm50, %v22, %v38
  %v52 = vrot.slane %v51, 3
  %vm53 = vcmask 1044484
  %v54 = vsel %vm53, %v22, %v38
  %v55 = vrot.slane %v54, 4
  %vm56 = vcmask 1045509
  %v57 = vsel %vm56, %v22, %v38
  %v58 = vrot.slane %v57, 5
  %vm59 = vcmask 1046534
  %v60 = vsel %vm59, %v22, %v38
  %v61 = vrot.slane %v60, 6
  %vm62 = vcmask 1046528
  %v63 = vsel %vm62, %v38, %v22
  %v64 = vrot.slane %v63, 7
  %v65 = vsel %vm42, %v24, %v39
  %v66 = vsel %vm44, %v24, %v39
  %v67 = vrot.slane %v66, 1
  %v68 = vsel %vm47, %v24, %v39
  %v69 = vrot.slane %v68, 2
  %v70 = vsel %vm50, %v24, %v39
  %v71 = vrot.slane %v70, 3
  %v72 = vsel %vm53, %v24, %v39
  %v73 = vrot.slane %v72, 4
  %v74 = vsel %vm56, %v24, %v39
  %v75 = vrot.slane %v74, 5
  %v76 = vsel %vm59, %v24, %v39
  %v77 = vrot.slane %v76, 6
  %v78 = vsel %vm62, %v39, %v24
  %v79 = vrot.slane %v78, 7
  %v80 = vsel %vm42, %v26, %v40
  %v81 = vsel %vm44, %v26, %v40
  %v82 = vrot.slane %v81, 1
  %v83 = vsel %vm47, %v26, %v40
  %v84 = vrot.slane %v83, 2
  %v85 = vsel %vm50, %v26, %v40
  %v86 = vrot.slane %v85, 3
  %v87 = vsel %vm53, %v26, %v40
  %v88 = vrot.slane %v87, 4
  %v89 = vsel %vm56, %v26, %v40
  %v90 = vrot.slane %v89, 5
  %v91 = vsel %vm59, %v26, %v40
  %v92 = vrot.slane %v91, 6
  %v93 = vsel %vm62, %v40, %v26
  %v94 = vrot.slane %v93, 7
  %v95 = vsel %vm42, %v28, %v41
  %v96 = vsel %vm44, %v28, %v41
  %v97 = vrot.slane %v96, 1
  %v98 = vsel %vm47, %v28, %v41
  %v99 = vrot.slane %v98, 2
  %v100 = vsel %vm50, %v28, %v41
  %v101 = vrot.slane %v100, 3
  %v102 = vsel %vm53, %v28, %v41
  %v103 = vrot.slane %v102, 4
  %v104 = vsel %vm56, %v28, %v41
  %v105 = vrot.slane %v104, 5
  %v106 = vsel %vm59, %v28, %v41
  %v107 = vrot.slane %v106, 6
  %v108 = vsel %vm62, %v41, %v28
  %v109 = vrot.slane %v108, 7
  %v110 = vperm.slane %v43, 0
  %v111 = vperm.slane %v43, 1
  %v112 = vperm.slane %v46, 0
  %v113 = vperm.slane %v46, 1
  %v114 = vperm.slane %v49, 0
  %v115 = vperm.slane %v49, 1
  %v116 = vperm.slane %v52, 0
  %v117 = vperm.slane %v52, 1
  %v118 = vperm.slane %v55, 0
  %v119 = vperm.slane %v55, 1
  %v120 = vperm.slane %v58, 0
  %v121 = vperm.slane %v58, 1
  %v122 = vperm.slane %v61, 0
  %v123 = vperm.slane %v61, 1
  %v124 = vperm.slane %v64, 0
  %v125 = vperm.slane %v64, 1
  %v126 = vperm.slane %v65, 0
  %v127 = vperm.slane %v65, 1
  %v128 = vperm.slane %v67, 0
  %v129 = vperm.slane %v67, 1
  %v130 = vperm.slane %v69, 0
  %v131 = vperm.slane %v69, 1
  %v132 = vperm.slane %v71, 0
  %v133 = vperm.slane %v71, 1
  %v134 = vperm.slane %v73, 0
  %v135 = vperm.slane %v73, 1
  %v136 = vperm.slane %v75, 0
  %v137 = vperm.slane %v75, 1
  %v138 = vperm.slane %v77, 0
  %v139 = vperm.slane %v77, 1
  %v140 = vperm.slane %v79, 0
  %v141 = vperm.slane %v79, 1
  %v142 = vperm.slane %v80, 0
  %v143 = vperm.slane %v80, 1
  %v144 = vperm.slane %v82, 0
  %v145 = vperm.slane %v82, 1
  %v146 = vperm.slane %v84, 0
  %v147 = vperm.slane %v84, 1
  %v148 = vperm.slane %v86, 0
  %v149 = vperm.slane %v86, 1
  %v150 = vperm.slane %v88, 0
  %v151 = vperm.slane %v88, 1
  %v152 = vperm.slane %v90, 0
  %v153 = vperm.slane %v90, 1
  %v154 = vperm.slane %v92, 0
  %v155 = vperm.slane %v92, 1
  %v156 = vperm.slane %v94, 0
  %v157 = vperm.slane %v94, 1
  %v158 = vperm.slane %v95, 0
  %v159 = vperm.slane %v95, 1
  %v160 = vperm.slane %v97, 0
  %v161 = vperm.slane %v97, 1
  %v162 = vperm.slane %v99, 0
  %v163 = vperm.slane %v99, 1
  %v164 = vperm.slane %v101, 0
  %v165 = vperm.slane %v101, 1
  %v166 = vperm.slane %v103, 0
  %v167 = vperm.slane %v103, 1
  %v168 = vperm.slane %v105, 0
  %v169 = vperm.slane %v105, 1
  %v170 = vperm.slane %v107, 0
  %v171 = vperm.slane %v107, 1
  %v172 = vperm.slane %v109, 0
  %v173 = vperm.slane %v109, 1
  %v238 = vmul.f32 %v110, %v14
  %v239 = vmul.f32 %v111, %v15
  %v240 = vmul.f32 %v110, %v16
  %v241 = vmul.f32 %v111, %v17
  %v242 = vmul.f32 %v110, %v18
  %v243 = vmul.f32 %v111, %v19
  %v244 = vmul.f32 %v110, %v20
  %v245 = vmul.f32 %v111, %v21
  %v246 = vmul.f32 %v112, %v14
  %v247 = vmul.f32 %v113, %v15
  %v248 = vmul.f32 %v112, %v16
  %v249 = vmul.f32 %v113, %v17
  %v250 = vmul.f32 %v112, %v18
  %v251 = vmul.f32 %v113, %v19
  %v252 = vmul.f32 %v112, %v20
  %v253 = vmul.f32 %v113, %v21
  %v254 = vmul.f32 %v114, %v14
  %v255 = vmul.f32 %v115, %v15
  %v256 = vmul.f32 %v114, %v16
  %v257 = vmul.f32 %v115, %v17
  %v258 = vmul.f32 %v114, %v18
  %v259 = vmul.f32 %v115, %v19
  %v260 = vmul.f32 %v114, %v20
  %v261 = vmul.f32 %v115, %v21
  %v262 = vmul.f32 %v116, %v14
  %v263 = vmul.f32 %v117, %v15
  %v264 = vmul.f32 %v116, %v16
  %v265 = vmul.f32 %v117, %v17
  %v266 = vmul.f32 %v116, %v18
  %v267 = vmul.f32 %v117, %v19
  %v268 = vmul.f32 %v116, %v20
  %v269 = vmul.f32 %v117, %v21
  %v270 = vmul.f32 %v118, %v14
  %v271 = vmul.f32 %v119, %v15
  %v272 = vmul.f32 %v118, %v16
  %v273 = vmul.f32 %v119, %v17
  %v274 = vmul.f32 %v118, %v18
  %v275 = vmul.f32 %v119, %v19
  %v276 = vmul.f32 %v118, %v20
  %v277 = vmul.f32 %v119, %v21
  %v278 = vmul.f32 %v120, %v14
  %v279 = vmul.f32 %v121, %v15
  %v280 = vmul.f32 %v120, %v16
  %v281 = vmul.f32 %v121, %v17
  %v282 = vmul.f32 %v120, %v18
  %v283 = vmul.f32 %v121, %v19
  %v284 = vmul.f32 %v120, %v20
  %v285 = vmul.f32 %v121, %v21
  %v286 = vmul.f32 %v122, %v14
  %v287 = vmul.f32 %v123, %v15
  %v288 = vmul.f32 %v122, %v16
  %v289 = vmul.f32 %v123, %v17
  %v290 = vmul.f32 %v122, %v18
  %v291 = vmul.f32 %v123, %v19
  %v292 = vmul.f32 %v122, %v20
  %v293 = vmul.f32 %v123, %v21
  %v294 = vmul.f32 %v124, %v14
  %v295 = vmul.f32 %v125, %v15
  %v296 = vmul.f32 %v124, %v16
  %v297 = vmul.f32 %v125, %v17
  %v298 = vmul.f32 %v124, %v18
  %v299 = vmul.f32 %v125, %v19
  %v300 = vmul.f32 %v124, %v20
  %v301 = vmul.f32 %v125, %v21
  %v302 = vmul.f32 %v126, %v14
  %v303 = vmul.f32 %v127, %v15
  %v304 = vmul.f32 %v126, %v16
  %v305 = vmul.f32 %v127, %v17
  %v306 = vmul.f32 %v126, %v18
  %v307 = vmul.f32 %v127, %v19
  %v308 = vmul.f32 %v126, %v20
  %v309 = vmul.f32 %v127, %v21
  %v310 = vmul.f32 %v128, %v14
  %v311 = vmul.f32 %v129, %v15
  %v312 = vmul.f32 %v128, %v16
  %v313 = vmul.f32 %v129, %v17
  %v314 = vmul.f32 %v128, %v18
  %v315 = vmul.f32 %v129, %v19
  %v316 = vmul.f32 %v128, %v20
  %v317 = vmul.f32 %v129, %v21
  %v318 = vmul.f32 %v130, %v14
  %v319 = vmul.f32 %v131, %v15
  %v320 = vmul.f32 %v130, %v16
  %v321 = vmul.f32 %v131, %v17
  %v322 = vmul.f32 %v130, %v18
  %v323 = vmul.f32 %v131, %v19
  %v324 = vmul.f32 %v130, %v20
  %v325 = vmul.f32 %v131, %v21
  %v326 = vmul.f32 %v132, %v14
  %v327 = vmul.f32 %v133, %v15
  %v328 = vmul.f32 %v132, %v16
  %v329 = vmul.f32 %v133, %v17
  %v330 = vmul.f32 %v132, %v18
  %v331 = vmul.f32 %v133, %v19
  %v332 = vmul.f32 %v132, %v20
  %v333 = vmul.f32 %v133, %v21
  %v334 = vmul.f32 %v134, %v14
  %v335 = vmul.f32 %v135, %v15
  %v336 = vmul.f32 %v134, %v16
  %v337 = vmul.f32 %v135, %v17
  %v338 = vmul.f32 %v134, %v18
  %v339 = vmul.f32 %v135, %v19
  %v340 = vmul.f32 %v134, %v20
  %v341 = vmul.f32 %v135, %v21
  %v342 = vmul.f32 %v136, %v14
  %v343 = vmul.f32 %v137, %v15
  %v344 = vmul.f32 %v136, %v16
  %v345 = vmul.f32 %v137, %v17
  %v346 = vmul.f32 %v136, %v18
  %v347 = vmul.f32 %v137, %v19
  %v348 = vmul.f32 %v136, %v20
  %v349 = vmul.f32 %v137, %v21
  %v350 = vmul.f32 %v138, %v14
  %v351 = vmul.f32 %v139, %v15
  %v352 = vmul.f32 %v138, %v16
  %v353 = vmul.f32 %v139, %v17
  %v354 = vmul.f32 %v138, %v18
  %v355 = vmul.f32 %v139, %v19
  %v356 = vmul.f32 %v138, %v20
  %v357 = vmul.f32 %v139, %v21
  %v358 = vmul.f32 %v140, %v14
  %v359 = vmul.f32 %v141, %v15
  %v360 = vmul.f32 %v140, %v16
  %v361 = vmul.f32 %v141, %v17
  %v362 = vmul.f32 %v140, %v18
  %v363 = vmul.f32 %v141, %v19
  %v364 = vmul.f32 %v140, %v20
  %v365 = vmul.f32 %v141, %v21
  %v366 = vmul.f32 %v142, %v14
  %v367 = vmul.f32 %v143, %v15
  %v368 = vmul.f32 %v142, %v16
  %v369 = vmul.f32 %v143, %v17
  %v370 = vmul.f32 %v142, %v18
  %v371 = vmul.f32 %v143, %v19
  %v372 = vmul.f32 %v142, %v20
  %v373 = vmul.f32 %v143, %v21
  %v374 = vmul.f32 %v144, %v14
  %v375 = vmul.f32 %v145, %v15
  %v376 = vmul.f32 %v144, %v16
  %v377 = vmul.f32 %v145, %v17
  %v378 = vmul.f32 %v144, %v18
  %v379 = vmul.f32 %v145, %v19
  %v380 = vmul.f32 %v144, %v20
  %v381 = vmul.f32 %v145, %v21
  %v382 = vmul.f32 %v146, %v14
  %v383 = vmul.f32 %v147, %v15
  %v384 = vmul.f32 %v146, %v16
  %v385 = vmul.f32 %v147, %v17
  %v386 = vmul.f32 %v146, %v18
  %v387 = vmul.f32 %v147, %v19
  %v388 = vmul.f32 %v146, %v20
  %v389 = vmul.f32 %v147, %v21
  %v390 = vmul.f32 %v148, %v14
  %v391 = vmul.f32 %v149, %v15
  %v392 = vmul.f32 %v148, %v16
  %v393 = vmul.f32 %v149, %v17
  %v394 = vmul.f32 %v148, %v18
  %v395 = vmul.f32 %v149, %v19
  %v396 = vmul.f32 %v148, %v20
  %v397 = vmul.f32 %v149, %v21
  %v398 = vmul.f32 %v150, %v14
  %v399 = vmul.f32 %v151, %v15
  %v400 = vmul.f32 %v150, %v16
  %v401 = vmul.f32 %v151, %v17
  %v402 = vmul.f32 %v150, %v18
  %v403 = vmul.f32 %v151, %v19
  %v404 = vmul.f32 %v150, %v20
  %v405 = vmul.f32 %v151, %v21
  %v406 = vmul.f32 %v152, %v14
  %v407 = vmul.f32 %v153, %v15
  %v408 = vmul.f32 %v152, %v16
  %v409 = vmul.f32 %v153, %v17
  %v410 = vmul.f32 %v152, %v18
  %v411 = vmul.f32 %v153, %v19
  %v412 = vmul.f32 %v152, %v20
  %v413 = vmul.f32 %v153, %v21
  %v414 = vmul.f32 %v154, %v14
  %v415 = vmul.f32 %v155, %v15
  %v416 = vmul.f32 %v154, %v16
  %v417 = vmul.f32 %v155, %v17
  %v418 = vmul.f32 %v154, %v18
  %v419 = vmul.f32 %v155, %v19
  %v420 = vmul.f32 %v154, %v20
  %v421 = vmul.f32 %v155, %v21
  %v422 = vmul.f32 %v156, %v14
  %v423 = vmul.f32 %v157, %v15
  %v424 = vmul.f32 %v156, %v16
  %v425 = vmul.f32 %v157, %v17
  %v426 = vmul.f32 %v156, %v18
  %v427 = vmul.f32 %v157, %v19
  %v428 = vmul.f32 %v156, %v20
  %v429 = vmul.f32 %v157, %v21
  %v430 = vmul.f32 %v158, %v14
  %v431 = vmul.f32 %v159, %v15
  %v432 = vmul.f32 %v158, %v16
  %v433 = vmul.f32 %v159, %v17
  %v434 = vmul.f32 %v158, %v18
  %v435 = vmul.f32 %v159, %v19
  %v436 = vmul.f32 %v158, %v20
  %v437 = vmul.f32 %v159, %v21
  %v438 = vmul.f32 %v160, %v14
  %v439 = vmul.f32 %v161, %v15
  %v440 = vmul.f32 %v160, %v16
  %v441 = vmul.f32 %v161, %v17
  %v442 = vmul.f32 %v160, %v18
  %v443 = vmul.f32 %v161, %v19
  %v444 = vmul.f32 %v160, %v20
  %v445 = vmul.f32 %v161, %v21
  %v446 = vmul.f32 %v162, %v14
  %v447 = vmul.f32 %v163, %v15
  %v448 = vmul.f32 %v162, %v16
  %v449 = vmul.f32 %v163, %v17
  %v450 = vmul.f32 %v162, %v18
  %v451 = vmul.f32 %v163, %v19
  %v452 = vmul.f32 %v162, %v20
  %v453 = vmul.f32 %v163, %v21
  %v454 = vmul.f32 %v164, %v14
  %v455 = vmul.f32 %v165, %v15
  %v456 = vmul.f32 %v164, %v16
  %v457 = vmul.f32 %v165, %v17
  %v458 = vmul.f32 %v164, %v18
  %v459 = vmul.f32 %v165, %v19
  %v460 = vmul.f32 %v164, %v20
  %v461 = vmul.f32 %v165, %v21
  %v462 = vmul.f32 %v166, %v14
  %v463 = vmul.f32 %v167, %v15
  %v464 = vmul.f32 %v166, %v16
  %v465 = vmul.f32 %v167, %v17
  %v466 = vmul.f32 %v166, %v18
  %v467 = vmul.f32 %v167, %v19
  %v468 = vmul.f32 %v166, %v20
  %v469 = vmul.f32 %v167, %v21
  %v470 = vmul.f32 %v168, %v14
  %v471 = vmul.f32 %v169, %v15
  %v472 = vmul.f32 %v168, %v16
  %v473 = vmul.f32 %v169, %v17
  %v474 = vmul.f32 %v168, %v18
  %v475 = vmul.f32 %v169, %v19
  %v476 = vmul.f32 %v168, %v20
  %v477 = vmul.f32 %v169, %v21
  %v478 = vmul.f32 %v170, %v14
  %v479 = vmul.f32 %v171, %v15
  %v480 = vmul.f32 %v170, %v16
  %v481 = vmul.f32 %v171, %v17
  %v482 = vmul.f32 %v170, %v18
  %v483 = vmul.f32 %v171, %v19
  %v484 = vmul.f32 %v170, %v20
  %v485 = vmul.f32 %v171, %v21
  %v486 = vmul.f32 %v172, %v14
  %v487 = vmul.f32 %v173, %v15
  %v488 = vmul.f32 %v172, %v16
  %v489 = vmul.f32 %v173, %v17
  %v490 = vmul.f32 %v172, %v18
  %v491 = vmul.f32 %v173, %v19
  %v492 = vmul.f32 %v172, %v20
  %v493 = vmul.f32 %v173, %v21
  %v494 = vld [vmem:[%s2] sm:$0xff]
  %v495 = vld [vmem:[%s2 + $0x8] sm:$0xff]
  %v496 = vld [vmem:[%s2 + $0x10] sm:$0xff]
  %v497 = vld [vmem:[%s2 + $0x18] sm:$0xff]
  %v498 = vld [vmem:[%s2 + $0x20] sm:$0xff]
  %v499 = vld [vmem:[%s2 + $0x28] sm:$0xff]
  %v500 = vld [vmem:[%s2 + $0x30] sm:$0xff]
  %v501 = vld [vmem:[%s2 + $0x38] sm:$0xff]
  %v502 = vld [vmem:[%s2 + $0x40] sm:$0xff]
  %v503 = vld [vmem:[%s2 + $0x48] sm:$0xff]
  %v504 = vld [vmem:[%s2 + $0x50] sm:$0xff]
  %v505 = vld [vmem:[%s2 + $0x58] sm:$0xff]
  %v506 = vld [vmem:[%s2 + $0x60] sm:$0xff]
  %v507 = vld [vmem:[%s2 + $0x68] sm:$0xff]
  %v508 = vld [vmem:[%s2 + $0x70] sm:$0xff]
  %v509 = vld [vmem:[%s2 + $0x78] sm:$0xff]
  %510 = vmatpush.msra.mxu0 %v268
  %511 = vmatpush.msra.mxu0 %v266
  %512 = vmatpush.msra.mxu0 %v264
  %513 = vmatpush.msra.mxu0 %v262
  %514 = vmatpush.msra.mxu0 %v260
  %515 = vmatpush.msra.mxu0 %v258
  %516 = vmatpush.msra.mxu0 %v256
  %517 = vmatpush.msra.mxu0 %v254
  %518 = vmatpush.msra.mxu0 %v252
  %519 = vmatpush.msra.mxu0 %v250
  %520 = vmatpush.msra.mxu0 %v248
  %521 = vmatpush.msra.mxu0 %v246
  %522 = vmatpush.msra.mxu0 %v244
  %523 = vmatpush.msra.mxu0 %v242
  %524 = vmatpush.msra.mxu0 %v240
  %525 = vmatpush.msra.mxu0 %v238
  %526 = vmatmul.f32.gmra.mxu0 %v494
  %v527 = vpop.f32.mrf.mxu0
  %v528 = vadd.f32 0.0, %v527
  %529 = vmatmul.f32.gmra.mxu0 %v502
  %v530 = vpop.f32.mrf.mxu0
  %v531 = vadd.f32 0.0, %v530
  %532 = vdwg.mxu0
  %533 = vmatpush.msra.mxu0 %v300
  %534 = vmatpush.msra.mxu0 %v298
  %535 = vmatpush.msra.mxu0 %v296
  %536 = vmatpush.msra.mxu0 %v294
  %537 = vmatpush.msra.mxu0 %v292
  %538 = vmatpush.msra.mxu0 %v290
  %539 = vmatpush.msra.mxu0 %v288
  %540 = vmatpush.msra.mxu0 %v286
  %541 = vmatpush.msra.mxu0 %v284
  %542 = vmatpush.msra.mxu0 %v282
  %543 = vmatpush.msra.mxu0 %v280
  %544 = vmatpush.msra.mxu0 %v278
  %545 = vmatpush.msra.mxu0 %v276
  %546 = vmatpush.msra.mxu0 %v274
  %547 = vmatpush.msra.mxu0 %v272
  %548 = vmatpush.msra.mxu0 %v270
  %549 = vmatmul.f32.gmra.mxu0 %v495
  %v550 = vpop.f32.mrf.mxu0
  %v551 = vadd.f32 %v528, %v550
  %552 = vmatmul.f32.gmra.mxu0 %v503
  %v553 = vpop.f32.mrf.mxu0
  %v554 = vadd.f32 %v531, %v553
  %555 = vdwg.mxu0
  %556 = vmatpush.msra.mxu0 %v332
  %557 = vmatpush.msra.mxu0 %v330
  %558 = vmatpush.msra.mxu0 %v328
  %559 = vmatpush.msra.mxu0 %v326
  %560 = vmatpush.msra.mxu0 %v324
  %561 = vmatpush.msra.mxu0 %v322
  %562 = vmatpush.msra.mxu0 %v320
  %563 = vmatpush.msra.mxu0 %v318
  %564 = vmatpush.msra.mxu0 %v316
  %565 = vmatpush.msra.mxu0 %v314
  %566 = vmatpush.msra.mxu0 %v312
  %567 = vmatpush.msra.mxu0 %v310
  %568 = vmatpush.msra.mxu0 %v308
  %569 = vmatpush.msra.mxu0 %v306
  %570 = vmatpush.msra.mxu0 %v304
  %571 = vmatpush.msra.mxu0 %v302
  %572 = vmatmul.f32.gmra.mxu0 %v496
  %v573 = vpop.f32.mrf.mxu0
  %v574 = vadd.f32 %v551, %v573
  %575 = vmatmul.f32.gmra.mxu0 %v504
  %v576 = vpop.f32.mrf.mxu0
  %v577 = vadd.f32 %v554, %v576
  %578 = vdwg.mxu0
  %579 = vmatpush.msra.mxu0 %v364
  %580 = vmatpush.msra.mxu0 %v362
  %581 = vmatpush.msra.mxu0 %v360
  %582 = vmatpush.msra.mxu0 %v358
  %583 = vmatpush.msra.mxu0 %v356
  %584 = vmatpush.msra.mxu0 %v354
  %585 = vmatpush.msra.mxu0 %v352
  %586 = vmatpush.msra.mxu0 %v350
  %587 = vmatpush.msra.mxu0 %v348
  %588 = vmatpush.msra.mxu0 %v346
  %589 = vmatpush.msra.mxu0 %v344
  %590 = vmatpush.msra.mxu0 %v342
  %591 = vmatpush.msra.mxu0 %v340
  %592 = vmatpush.msra.mxu0 %v338
  %593 = vmatpush.msra.mxu0 %v336
  %594 = vmatpush.msra.mxu0 %v334
  %595 = vmatmul.f32.gmra.mxu0 %v497
  %v596 = vpop.f32.mrf.mxu0
  %v597 = vadd.f32 %v574, %v596
  %598 = vmatmul.f32.gmra.mxu0 %v505
  %v599 = vpop.f32.mrf.mxu0
  %v600 = vadd.f32 %v577, %v599
  %601 = vdwg.mxu0
  %602 = vmatpush.msra.mxu0 %v396
  %603 = vmatpush.msra.mxu0 %v394
  %604 = vmatpush.msra.mxu0 %v392
  %605 = vmatpush.msra.mxu0 %v390
  %606 = vmatpush.msra.mxu0 %v388
  %607 = vmatpush.msra.mxu0 %v386
  %608 = vmatpush.msra.mxu0 %v384
  %609 = vmatpush.msra.mxu0 %v382
  %610 = vmatpush.msra.mxu0 %v380
  %611 = vmatpush.msra.mxu0 %v378
  %612 = vmatpush.msra.mxu0 %v376
  %613 = vmatpush.msra.mxu0 %v374
  %614 = vmatpush.msra.mxu0 %v372
  %615 = vmatpush.msra.mxu0 %v370
  %616 = vmatpush.msra.mxu0 %v368
  %617 = vmatpush.msra.mxu0 %v366
  %618 = vmatmul.f32.gmra.mxu0 %v498
  %v619 = vpop.f32.mrf.mxu0
  %v620 = vadd.f32 %v597, %v619
  %621 = vmatmul.f32.gmra.mxu0 %v506
  %v622 = vpop.f32.mrf.mxu0
  %v623 = vadd.f32 %v600, %v622
  %624 = vdwg.mxu0
  %625 = vmatpush.msra.mxu0 %v428
  %626 = vmatpush.msra.mxu0 %v426
  %627 = vmatpush.msra.mxu0 %v424
  %628 = vmatpush.msra.mxu0 %v422
  %629 = vmatpush.msra.mxu0 %v420
  %630 = vmatpush.msra.mxu0 %v418
  %631 = vmatpush.msra.mxu0 %v416
  %632 = vmatpush.msra.mxu0 %v414
  %633 = vmatpush.msra.mxu0 %v412
  %634 = vmatpush.msra.mxu0 %v410
  %635 = vmatpush.msra.mxu0 %v408
  %636 = vmatpush.msra.mxu0 %v406
  %637 = vmatpush.msra.mxu0 %v404
  %638 = vmatpush.msra.mxu0 %v402
  %639 = vmatpush.msra.mxu0 %v400
  %640 = vmatpush.msra.mxu0 %v398
  %641 = vmatmul.f32.gmra.mxu0 %v499
  %v642 = vpop.f32.mrf.mxu0
  %v643 = vadd.f32 %v620, %v642
  %644 = vmatmul.f32.gmra.mxu0 %v507
  %v645 = vpop.f32.mrf.mxu0
  %v646 = vadd.f32 %v623, %v645
  %647 = vdwg.mxu0
  %648 = vmatpush.msra.mxu0 %v460
  %649 = vmatpush.msra.mxu0 %v458
  %650 = vmatpush.msra.mxu0 %v456
  %651 = vmatpush.msra.mxu0 %v454
  %652 = vmatpush.msra.mxu0 %v452
  %653 = vmatpush.msra.mxu0 %v450
  %654 = vmatpush.msra.mxu0 %v448
  %655 = vmatpush.msra.mxu0 %v446
  %656 = vmatpush.msra.mxu0 %v444
  %657 = vmatpush.msra.mxu0 %v442
  %658 = vmatpush.msra.mxu0 %v440
  %659 = vmatpush.msra.mxu0 %v438
  %660 = vmatpush.msra.mxu0 %v436
  %661 = vmatpush.msra.mxu0 %v434
  %662 = vmatpush.msra.mxu0 %v432
  %663 = vmatpush.msra.mxu0 %v430
  %664 = vmatmul.f32.gmra.mxu0 %v500
  %v665 = vpop.f32.mrf.mxu0
  %v666 = vadd.f32 %v643, %v665
  %667 = vmatmul.f32.gmra.mxu0 %v508
  %v668 = vpop.f32.mrf.mxu0
  %v669 = vadd.f32 %v646, %v668
  %670 = vdwg.mxu0
  %671 = vmatpush.msra.mxu0 %v492
  %672 = vmatpush.msra.mxu0 %v490
  %673 = vmatpush.msra.mxu0 %v488
  %674 = vmatpush.msra.mxu0 %v486
  %675 = vmatpush.msra.mxu0 %v484
  %676 = vmatpush.msra.mxu0 %v482
  %677 = vmatpush.msra.mxu0 %v480
  %678 = vmatpush.msra.mxu0 %v478
  %679 = vmatpush.msra.mxu0 %v476
  %680 = vmatpush.msra.mxu0 %v474
  %681 = vmatpush.msra.mxu0 %v472
  %682 = vmatpush.msra.mxu0 %v470
  %683 = vmatpush.msra.mxu0 %v468
  %684 = vmatpush.msra.mxu0 %v466
  %685 = vmatpush.msra.mxu0 %v464
  %686 = vmatpush.msra.mxu0 %v462
  %687 = vmatmul.f32.gmra.mxu0 %v501
  %v688 = vpop.f32.mrf.mxu0
  %v689 = vadd.f32 %v666, %v688
  %690 = vmatmul.f32.gmra.mxu0 %v509
  %v691 = vpop.f32.mrf.mxu0
  %v692 = vadd.f32 %v669, %v691
  %693 = vdwg.mxu0
  %694 = vmatpush.msra.mxu0 %v269
  %695 = vmatpush.msra.mxu0 %v267
  %696 = vmatpush.msra.mxu0 %v265
  %697 = vmatpush.msra.mxu0 %v263
  %698 = vmatpush.msra.mxu0 %v261
  %699 = vmatpush.msra.mxu0 %v259
  %700 = vmatpush.msra.mxu0 %v257
  %701 = vmatpush.msra.mxu0 %v255
  %702 = vmatpush.msra.mxu0 %v253
  %703 = vmatpush.msra.mxu0 %v251
  %704 = vmatpush.msra.mxu0 %v249
  %705 = vmatpush.msra.mxu0 %v247
  %706 = vmatpush.msra.mxu0 %v245
  %707 = vmatpush.msra.mxu0 %v243
  %708 = vmatpush.msra.mxu0 %v241
  %709 = vmatpush.msra.mxu0 %v239
  %710 = vmatmul.f32.gmra.mxu0 %v494
  %v711 = vpop.f32.mrf.mxu0
  %v712 = vadd.f32 0.0, %v711
  %713 = vmatmul.f32.gmra.mxu0 %v502
  %v714 = vpop.f32.mrf.mxu0
  %v715 = vadd.f32 0.0, %v714
  %716 = vdwg.mxu0
  %717 = vmatpush.msra.mxu0 %v301
  %718 = vmatpush.msra.mxu0 %v299
  %719 = vmatpush.msra.mxu0 %v297
  %720 = vmatpush.msra.mxu0 %v295
  %721 = vmatpush.msra.mxu0 %v293
  %722 = vmatpush.msra.mxu0 %v291
  %723 = vmatpush.msra.mxu0 %v289
  %724 = vmatpush.msra.mxu0 %v287
  %725 = vmatpush.msra.mxu0 %v285
  %726 = vmatpush.msra.mxu0 %v283
  %727 = vmatpush.msra.mxu0 %v281
  %728 = vmatpush.msra.mxu0 %v279
  %729 = vmatpush.msra.mxu0 %v277
  %730 = vmatpush.msra.mxu0 %v275
  %731 = vmatpush.msra.mxu0 %v273
  %732 = vmatpush.msra.mxu0 %v271
  %733 = vmatmul.f32.gmra.mxu0 %v495
  %v734 = vpop.f32.mrf.mxu0
  %v735 = vadd.f32 %v712, %v734
  %736 = vmatmul.f32.gmra.mxu0 %v503
  %v737 = vpop.f32.mrf.mxu0
  %v738 = vadd.f32 %v715, %v737
  %739 = vdwg.mxu0
  %740 = vmatpush.msra.mxu0 %v333
  %741 = vmatpush.msra.mxu0 %v331
  %742 = vmatpush.msra.mxu0 %v329
  %743 = vmatpush.msra.mxu0 %v327
  %744 = vmatpush.msra.mxu0 %v325
  %745 = vmatpush.msra.mxu0 %v323
  %746 = vmatpush.msra.mxu0 %v321
  %747 = vmatpush.msra.mxu0 %v319
  %748 = vmatpush.msra.mxu0 %v317
  %749 = vmatpush.msra.mxu0 %v315
  %750 = vmatpush.msra.mxu0 %v313
  %751 = vmatpush.msra.mxu0 %v311
  %752 = vmatpush.msra.mxu0 %v309
  %753 = vmatpush.msra.mxu0 %v307
  %754 = vmatpush.msra.mxu0 %v305
  %755 = vmatpush.msra.mxu0 %v303
  %756 = vmatmul.f32.gmra.mxu0 %v496
  %v757 = vpop.f32.mrf.mxu0
  %v758 = vadd.f32 %v735, %v757
  %759 = vmatmul.f32.gmra.mxu0 %v504
  %v760 = vpop.f32.mrf.mxu0
  %v761 = vadd.f32 %v738, %v760
  %762 = vdwg.mxu0
  %763 = vmatpush.msra.mxu0 %v365
  %764 = vmatpush.msra.mxu0 %v363
  %765 = vmatpush.msra.mxu0 %v361
  %766 = vmatpush.msra.mxu0 %v359
  %767 = vmatpush.msra.mxu0 %v357
  %768 = vmatpush.msra.mxu0 %v355
  %769 = vmatpush.msra.mxu0 %v353
  %770 = vmatpush.msra.mxu0 %v351
  %771 = vmatpush.msra.mxu0 %v349
  %772 = vmatpush.msra.mxu0 %v347
  %773 = vmatpush.msra.mxu0 %v345
  %774 = vmatpush.msra.mxu0 %v343
  %775 = vmatpush.msra.mxu0 %v341
  %776 = vmatpush.msra.mxu0 %v339
  %777 = vmatpush.msra.mxu0 %v337
  %778 = vmatpush.msra.mxu0 %v335
  %779 = vmatmul.f32.gmra.mxu0 %v497
  %v780 = vpop.f32.mrf.mxu0
  %v781 = vadd.f32 %v758, %v780
  %782 = vmatmul.f32.gmra.mxu0 %v505
  %v783 = vpop.f32.mrf.mxu0
  %v784 = vadd.f32 %v761, %v783
  %785 = vdwg.mxu0
  %786 = vmatpush.msra.mxu0 %v397
  %787 = vmatpush.msra.mxu0 %v395
  %788 = vmatpush.msra.mxu0 %v393
  %789 = vmatpush.msra.mxu0 %v391
  %790 = vmatpush.msra.mxu0 %v389
  %791 = vmatpush.msra.mxu0 %v387
  %792 = vmatpush.msra.mxu0 %v385
  %793 = vmatpush.msra.mxu0 %v383
  %794 = vmatpush.msra.mxu0 %v381
  %795 = vmatpush.msra.mxu0 %v379
  %796 = vmatpush.msra.mxu0 %v377
  %797 = vmatpush.msra.mxu0 %v375
  %798 = vmatpush.msra.mxu0 %v373
  %799 = vmatpush.msra.mxu0 %v371
  %800 = vmatpush.msra.mxu0 %v369
  %801 = vmatpush.msra.mxu0 %v367
  %802 = vmatmul.f32.gmra.mxu0 %v498
  %v803 = vpop.f32.mrf.mxu0
  %v804 = vadd.f32 %v781, %v803
  %805 = vmatmul.f32.gmra.mxu0 %v506
  %v806 = vpop.f32.mrf.mxu0
  %v807 = vadd.f32 %v784, %v806
  %808 = vdwg.mxu0
  %809 = vmatpush.msra.mxu0 %v429
  %810 = vmatpush.msra.mxu0 %v427
  %811 = vmatpush.msra.mxu0 %v425
  %812 = vmatpush.msra.mxu0 %v423
  %813 = vmatpush.msra.mxu0 %v421
  %814 = vmatpush.msra.mxu0 %v419
  %815 = vmatpush.msra.mxu0 %v417
  %816 = vmatpush.msra.mxu0 %v415
  %817 = vmatpush.msra.mxu0 %v413
  %818 = vmatpush.msra.mxu0 %v411
  %819 = vmatpush.msra.mxu0 %v409
  %820 = vmatpush.msra.mxu0 %v407
  %821 = vmatpush.msra.mxu0 %v405
  %822 = vmatpush.msra.mxu0 %v403
  %823 = vmatpush.msra.mxu0 %v401
  %824 = vmatpush.msra.mxu0 %v399
  %825 = vmatmul.f32.gmra.mxu0 %v499
  %v826 = vpop.f32.mrf.mxu0
  %v827 = vadd.f32 %v804, %v826
  %828 = vmatmul.f32.gmra.mxu0 %v507
  %v829 = vpop.f32.mrf.mxu0
  %v830 = vadd.f32 %v807, %v829
  %831 = vdwg.mxu0
  %832 = vmatpush.msra.mxu0 %v461
  %833 = vmatpush.msra.mxu0 %v459
  %834 = vmatpush.msra.mxu0 %v457
  %835 = vmatpush.msra.mxu0 %v455
  %836 = vmatpush.msra.mxu0 %v453
  %837 = vmatpush.msra.mxu0 %v451
  %838 = vmatpush.msra.mxu0 %v449
  %839 = vmatpush.msra.mxu0 %v447
  %840 = vmatpush.msra.mxu0 %v445
  %841 = vmatpush.msra.mxu0 %v443
  %842 = vmatpush.msra.mxu0 %v441
  %843 = vmatpush.msra.mxu0 %v439
  %844 = vmatpush.msra.mxu0 %v437
  %845 = vmatpush.msra.mxu0 %v435
  %846 = vmatpush.msra.mxu0 %v433
  %847 = vmatpush.msra.mxu0 %v431
  %848 = vmatmul.f32.gmra.mxu0 %v500
  %v849 = vpop.f32.mrf.mxu0
  %v850 = vadd.f32 %v827, %v849
  %851 = vmatmul.f32.gmra.mxu0 %v508
  %v852 = vpop.f32.mrf.mxu0
  %v853 = vadd.f32 %v830, %v852
  %854 = vdwg.mxu0
  %855 = vmatpush.msra.mxu0 %v493
  %856 = vmatpush.msra.mxu0 %v491
  %857 = vmatpush.msra.mxu0 %v489
  %858 = vmatpush.msra.mxu0 %v487
  %859 = vmatpush.msra.mxu0 %v485
  %860 = vmatpush.msra.mxu0 %v483
  %861 = vmatpush.msra.mxu0 %v481
  %862 = vmatpush.msra.mxu0 %v479
  %863 = vmatpush.msra.mxu0 %v477
  %864 = vmatpush.msra.mxu0 %v475
  %865 = vmatpush.msra.mxu0 %v473
  %866 = vmatpush.msra.mxu0 %v471
  %867 = vmatpush.msra.mxu0 %v469
  %868 = vmatpush.msra.mxu0 %v467
  %869 = vmatpush.msra.mxu0 %v465
  %870 = vmatpush.msra.mxu0 %v463
  %871 = vmatmul.f32.gmra.mxu0 %v501
  %v872 = vpop.f32.mrf.mxu0
  %v873 = vadd.f32 %v850, %v872
  %874 = vmatmul.f32.gmra.mxu0 %v509
  %v875 = vpop.f32.mrf.mxu0
  %v876 = vadd.f32 %v853, %v875
  %877 = vdwg.mxu0
  %878 = vst [vmem:[%s3] sm:$0xff] %v689
  %879 = vst [vmem:[%s3 + $0x8] sm:$0xff] %v873
  %880 = vst [vmem:[%s3 + $0x10] sm:$0xff] %v692
  %881 = vst [vmem:[%s3 + $0x18] sm:$0xff] %v876
  // Predicated region
  $region14: #{cin_forward.1} parent=0 // pred_check
    _
  $region15: #{cin_forward.1} parent=0 // pred_check_branch
    %883 = sbr.rel (0) target = $region17
  $region16: #{cin_forward.1} parent=0 // pred_region
    _
  $region17: #{cin_forward.1} parent=0 // pred_fallthru
    _
  // Predicated region
  $region18: #{cin_forward.1} parent=0 // pred_check
    _
  $region19: #{cin_forward.1} parent=0 // pred_check_branch
    %885 = sbr.rel (0) target = $region21
  $region20: #{cin_forward.1} parent=0 // pred_region
    _
  $region21: #{cin_forward.1} parent=0 // pred_fallthru
    _

</llo_original>
